<compile_context>
chip_gen: v5e
topology: v5e:2x2
jax: 0.10.0
libtpu: 0.0.40
codegen_flags: <defaults>
</compile_context>

<pallas_src>
import jax
import jax.numpy as jnp
import numpy as np
from jax.experimental import pallas as pl
from jax.experimental.pallas import tpu as pltpu


def _patch_embed_kernel(p_ref, w_ref, pos_ref, o_ref):
    # p_ref:   (Bt, N, P)  bf16  patches for Bt batch elements
    # w_ref:   (P, E)      bf16  projection weight (patch_dim x embed_dim)
    # pos_ref: (N, E)      f32   positional embedding with bias folded in
    # o_ref:   (Bt, N, E)         output block (f32 by default)
    bt, n, pdim = p_ref.shape
    e = w_ref.shape[1]
    # Leading-dim merge only (N is sublane-aligned) -> no relayout copy; the
    # 2-D jnp.dot is the form Mosaic lowers straight to the MXU, accumulating
    # in f32 (preferred_element_type).
    proj = jnp.dot(p_ref[...].reshape(bt * n, pdim), w_ref[...],
                   preferred_element_type=jnp.float32)
    o_ref[...] = (proj.reshape(bt, n, e) + pos_ref[...][None]).astype(o_ref.dtype)


def _tile_bytes(shape, dtype):
    """VMEM footprint of one buffer, including (sublane, 128) tile padding."""
    itemsize = int(np.dtype(dtype).itemsize)
    sublane = 8 * max(1, 4 // itemsize)        # 8 for f32, 16 for bf16, 32 for i8
    dims = list(shape)
    dims[-1] = -(-dims[-1] // 128) * 128
    if len(dims) >= 2:
        dims[-2] = -(-dims[-2] // sublane) * sublane
    total = itemsize
    for d in dims:
        total *= d
    return total


def _tpu_generation_info():
    """(physical VMEM bytes per core, TensorCores per device) with safe fallbacks."""
    vmem_capacity = 64 * 1024 * 1024           # conservative (v7x-sized) fallback
    num_cores = 1
    try:
        info = pltpu.get_tpu_info()
        vmem_capacity = int(getattr(info, "vmem_capacity_bytes", vmem_capacity))
    except Exception:
        pass
    try:
        kind = jax.devices()[0].device_kind.lower()
        # Megacore chips (2 TensorCores behind one device): v4, v5p, v7x.
        if any(tag in kind for tag in ("v4", "v5p", "7x", "v7")):
            num_cores = 2
    except Exception:
        pass
    return vmem_capacity, num_cores


def _pick_batch_tile(batch, n, p_dim, e, out_dtype, num_cores, vmem_budget_bytes):
    """Pick the batch tile Bt and report its per-step VMEM working set."""
    def bytes_needed(bt):
        return (2 * _tile_bytes((bt, n, p_dim), jnp.bfloat16)   # patches, double-buffered
                + 2 * _tile_bytes((bt, n, e), out_dtype)        # output, double-buffered
                + _tile_bytes((bt, n, e), jnp.float32)          # f32 MXU result scratch
                + 2 * _tile_bytes((p_dim, e), jnp.bfloat16)     # weight^T (grid-invariant)
                + 2 * _tile_bytes((n, e), jnp.float32))         # pos + bias (grid-invariant)

    fitting = [bt for bt in range(1, batch + 1)
               if bytes_needed(bt) <= vmem_budget_bytes]
    if not fitting:
        return 1, bytes_needed(1)

    def steps(bt):
        return -(-batch // bt)

    def waste(bt):                              # padded batch rows (wasted traffic)
        return steps(bt) * bt - batch

    if num_cores <= 1:
        # Single TensorCore (v5e/v6e): fewest ~0.35us grid steps wins, then
        # least padding, then the largest tile.
        best = min(fitting, key=lambda bt: (steps(bt), waste(bt), -bt))
    else:
        # Megacore (v7x): prefer an even grid with >= 2 steps per core so both
        # cores get balanced work and DMA/compute overlap within each core.
        def tier(bt):
            s = steps(bt)
            if s % num_cores == 0 and s >= 2 * num_cores:
                return 0
            if s % num_cores == 0 and s >= num_cores:
                return 1
            if s >= num_cores:
                return 2
            return 3
        best = min(fitting, key=lambda bt: (tier(bt), steps(bt), waste(bt), -bt))
    return best, bytes_needed(best)


def patch_embedder_pallas(x, proj_weight, proj_bias, pos_embedding, patch_size,
                          out_dtype=jnp.float32):
    """Forward pass of PatchEmbedder.

    x:             (B, H, W) float32  (matches torch: no channel dim)
    proj_weight:   (E, P)    nn.Linear weight, P = patch_size**2
    proj_bias:     (E,)      nn.Linear bias
    pos_embedding: (1, N, E) positional embedding, N = (H//p)*(W//p)
    Returns (B, N, E) in out_dtype (float32 by default).
    """
    B, H, W = x.shape
    p = patch_size
    nh, nw = H // p, W // p
    N = nh * nw
    P = p * p
    E = proj_weight.shape[0]

    # --- wrapper glue: torch unfold/unfold/view equivalent ---
    # TODO(synk): fusing this lane-splitting patchify into the kernel is left
    # out (Mosaic relayout); bf16 halves the materialized intermediate instead.
    patches = (x.reshape(B, nh, p, nw, p)
                 .transpose(0, 1, 3, 2, 4)
                 .reshape(B, N, P)
                 .astype(jnp.bfloat16))
    weight_t = proj_weight.T.astype(jnp.bfloat16)                    # (P, E)
    pos_plus_bias = (pos_embedding.reshape(N, E)
                     + proj_bias.reshape(1, E)).astype(jnp.float32)  # (N, E)

    vmem_capacity, num_cores = _tpu_generation_info()
    vmem_budget = vmem_capacity // 3
    bt, step_bytes = _pick_batch_tile(B, N, P, E, out_dtype, num_cores, vmem_budget)

    grid_b = pl.cdiv(B, bt)
    b_pad = grid_b * bt
    if b_pad != B:
        patches = jnp.pad(patches, ((0, b_pad - B), (0, 0), (0, 0)))

    # Scoped-VMEM limit: working set + headroom, never below 32 MiB (raises
    # v5e's 16 MiB default) and always inside physical VMEM.
    vmem_limit = int(min(max(int(step_bytes * 1.5), 32 * 1024 * 1024),
                         int(0.9 * vmem_capacity)))

    out = pl.pallas_call(
        _patch_embed_kernel,
        out_shape=jax.ShapeDtypeStruct((b_pad, N, E), out_dtype),
        grid_spec=pltpu.PrefetchScalarGridSpec(
            num_scalar_prefetch=0,
            grid=(grid_b,),
            in_specs=[
                pl.BlockSpec((bt, N, P), lambda b: (b, 0, 0)),   # patches
                pl.BlockSpec((P, E), lambda b: (0, 0)),          # weight^T
                pl.BlockSpec((N, E), lambda b: (0, 0)),          # pos + bias
            ],
            out_specs=pl.BlockSpec((bt, N, E), lambda b: (b, 0, 0)),
        ),
        compiler_params=pltpu.CompilerParams(
            dimension_semantics=("parallel",),
            vmem_limit_bytes=vmem_limit),
    )(patches, weight_t, pos_plus_bias)

    return out[:B] if b_pad != B else out


if __name__ == "__main__":
    # Module defaults: image_size=56, patch_size=7, embed_dim=256
    # -> num_patches = 64, patch_dim = 49.
    batch = 8
    image_size = 56
    patch_size = 7
    embed_dim = 256
    num_patches = (image_size // patch_size) ** 2
    patch_dim = patch_size ** 2

    key = jax.random.PRNGKey(0)
    kx, kw, kb, kp = jax.random.split(key, 4)

    x = jax.random.normal(kx, (batch, image_size, image_size), dtype=jnp.float32)
    # nn.Linear(patch_dim, embed_dim): weight (E, P), bias (E,)
    proj_weight = (jax.random.normal(kw, (embed_dim, patch_dim), dtype=jnp.float32)
                   * (1.0 / jnp.sqrt(patch_dim)))
    proj_bias = jax.random.normal(kb, (embed_dim,), dtype=jnp.float32) * 0.01
    # nn.Parameter(torch.rand(1, num_patches, embed_dim)) -> uniform [0, 1)
    pos_embedding = jax.random.uniform(
        kp, (1, num_patches, embed_dim), dtype=jnp.float32)

    out = patch_embedder_pallas(x, proj_weight, proj_bias, pos_embedding,
                                patch_size)
    out = jax.block_until_ready(out)
    assert out.shape == (batch, num_patches, embed_dim)

    # Reference with the same bf16 operand rounding + f32 accumulation.
    p = patch_size
    nh = image_size // p
    nw = image_size // p
    patches_ref = (x.reshape(batch, nh, p, nw, p)
                     .transpose(0, 1, 3, 2, 4)
                     .reshape(batch, num_patches, patch_dim))
    a = patches_ref.astype(jnp.bfloat16).astype(jnp.float32)
    w = proj_weight.T.astype(jnp.bfloat16).astype(jnp.float32)
    ref_bf16 = (jnp.matmul(a, w, precision=jax.lax.Precision.HIGHEST)
                + proj_bias + pos_embedding)
    assert jnp.allclose(out, ref_bf16, atol=2e-3, rtol=2e-3), \
        float(jnp.max(jnp.abs(out - ref_bf16)))

    # Loose check against the pure-f32 reference (bf16 operand rounding only).
    ref_f32 = (jnp.matmul(patches_ref, proj_weight.T,
                          precision=jax.lax.Precision.HIGHEST)
               + proj_bias + pos_embedding)
    assert jnp.allclose(out, ref_f32, atol=0.15, rtol=0.05)

    print("KERNEL_OK")
</pallas_src>

<mosaic_0001>
module attributes {stable_mosaic.version = 11 : i64} {
  func.func @_patch_embed_kernel(%arg0: i32, %arg1: memref<8x64x49xbf16, #tpu.memory_space<vmem>>, %arg2: memref<49x256xbf16, #tpu.memory_space<vmem>>, %arg3: memref<64x256xf32, #tpu.memory_space<vmem>>, %arg4: memref<8x64x256xf32, #tpu.memory_space<vmem>>) attributes {dimension_semantics = [#tpu.dimension_semantics<parallel>], iteration_bounds = array<i64: 1>, scalar_prefetch = 0 : i64, scratch_operands = 0 : i64, tpu.core_type = #tpu.core_type<tc>, window_params = [{transform_indices = @transform_0, window_bounds = array<i64: 8, 64, 49>}, {pipeline_mode = #tpu.pipeline_mode<synchronous>, transform_indices = @transform_1, window_bounds = array<i64: 49, 256>}, {pipeline_mode = #tpu.pipeline_mode<synchronous>, transform_indices = @transform_2, window_bounds = array<i64: 64, 256>}, {transform_indices = @transform_3, window_bounds = array<i64: 8, 64, 256>}]} {
    %c0 = arith.constant 0 : index
    %c0_0 = arith.constant 0 : index
    %c0_1 = arith.constant 0 : index
    %0 = vector.load %arg1[%c0, %c0_0, %c0_1] : memref<8x64x49xbf16, #tpu.memory_space<vmem>>, vector<8x64x49xbf16>
    %1 = vector.shape_cast %0 : vector<8x64x49xbf16> to vector<512x49xbf16>
    %c0_2 = arith.constant 0 : index
    %c0_3 = arith.constant 0 : index
    %2 = vector.load %arg2[%c0_2, %c0_3] : memref<49x256xbf16, #tpu.memory_space<vmem>>, vector<49x256xbf16>
    %cst = arith.constant dense<0.000000e+00> : vector<512x256xf32>
    %3 = tpu.matmul %1, %2, %cst {dimension_numbers = #tpu.dot_dimension_numbers<[1], [0], [0], [1], [0, 0, 1, 1], [], []>} : vector<512x49xbf16>, vector<49x256xbf16>, vector<512x256xf32> -> vector<512x256xf32>
    %4 = vector.shape_cast %3 : vector<512x256xf32> to vector<8x64x256xf32>
    %c0_4 = arith.constant 0 : index
    %c0_5 = arith.constant 0 : index
    %5 = vector.load %arg3[%c0_4, %c0_5] : memref<64x256xf32, #tpu.memory_space<vmem>>, vector<64x256xf32>
    %6 = vector.shape_cast %5 : vector<64x256xf32> to vector<1x64x256xf32>
    %7 = vector.broadcast %6 : vector<1x64x256xf32> to vector<8x64x256xf32>
    %8 = arith.addf %4, %7 : vector<8x64x256xf32>
    %c0_6 = arith.constant 0 : index
    %c0_7 = arith.constant 0 : index
    %c0_8 = arith.constant 0 : index
    %9 = vector.load %arg4[%c0_6, %c0_7, %c0_8] : memref<8x64x256xf32, #tpu.memory_space<vmem>>, vector<8x64x256xf32>
    tpu.vector_store %arg4[%c0_6, %c0_7, %c0_8], %8 {strides = array<i32>} : memref<8x64x256xf32, #tpu.memory_space<vmem>>, vector<8x64x256xf32>,
    return
  }
  func.func @transform_0(%arg0: i32) -> (i32, i32, i32) {
    %c0_i32 = arith.constant 0 : i32
    %c0_i32_0 = arith.constant 0 : i32
    %c0_i32_1 = arith.constant 0 : i32
    return %arg0, %c0_i32, %c0_i32_0 : i32, i32, i32
  }
  func.func @transform_1(%arg0: i32) -> (i32, i32) {
    %c0_i32 = arith.constant 0 : i32
    %c0_i32_0 = arith.constant 0 : i32
    %c0_i32_1 = arith.constant 0 : i32
    return %c0_i32, %c0_i32_0 : i32, i32
  }
  func.func @transform_2(%arg0: i32) -> (i32, i32) {
    %c0_i32 = arith.constant 0 : i32
    %c0_i32_0 = arith.constant 0 : i32
    %c0_i32_1 = arith.constant 0 : i32
    return %c0_i32, %c0_i32_0 : i32, i32
  }
  func.func @transform_3(%arg0: i32) -> (i32, i32, i32) {
    %c0_i32 = arith.constant 0 : i32
    %c0_i32_0 = arith.constant 0 : i32
    %c0_i32_1 = arith.constant 0 : i32
    return %arg0, %c0_i32, %c0_i32_0 : i32, i32, i32
  }
}

</mosaic_0001>

<llo_original>
// kernel: tpu_custom_call.1
$region0: #{tpu_custom_call.1}
  #allocation0 [shape = 'u32[]', space=smem, size = 0x4, offset = 0x4, fixed_abs, tag = 'smem constant byte address 0x4 - core index']
  #allocation1 [shape = 'u32[72,128]{1,0:T(1,128)}', space=vmem, size = 0x9000, scoped, tag = 'internal scratch']
  %s0 = inlined_call_operand.vmem [shape: bf16[8,64,49], index: 0, kind: input, shape index: {}]
  %s1 = inlined_call_operand.vmem [shape: bf16[49,256], index: 1, kind: input, shape index: {}]
  %s2 = inlined_call_operand.vmem [shape: f32[64,256], index: 2, kind: input, shape index: {}]
  %s3 = inlined_call_operand.hbm [shape: f32[8,64,256], index: 3, kind: output, shape index: {}]
  %s4 = sld [smem:[#allocation0]]
  $region22: #{tpu_custom_call.1} parent=0
    _
  %s6 = ssub.s32 1, %s4
  %s7 = scalar_select 0, %s6, %s4
  $region1: #{tpu_custom_call.1} parent=0
    #allocation2 [shape = 'u8[524288]{0}', space=vmem, size = 0x80000, scoped, tag = 'output window, operand 0, single buffered']
    #allocation3 [shape = 's32[1]{0}', space=sflag, size = 0x4, scoped, tag = 'scoped memory for tpu_custom_call.1']
    %8 = vsyncpa [#allocation3], 0
    // Predicated region
    $region2: #{tpu_custom_call.1} parent=1 // pred_check
      _
    $region3: #{tpu_custom_call.1} parent=1 // pred_check_branch
      %10 = sbr.rel (0) target = $region5
    $region4: #{tpu_custom_call.1} parent=1 // pred_region
      _
    $region5: #{tpu_custom_call.1} parent=1 // pred_fallthru
      _
    // Predicated region
    $region6: #{tpu_custom_call.1} parent=1 // pred_check
      _
    $region7: #{tpu_custom_call.1} parent=1 // pred_check_branch
      %12 = sbr.rel (0) target = $region9
    $region8: #{tpu_custom_call.1} parent=1 // pred_region
      _
    $region9: #{tpu_custom_call.1} parent=1 // pred_fallthru
      _
    // Predicated region
    $region10: #{tpu_custom_call.1} parent=1 // pred_check
      _
    $region11: #{tpu_custom_call.1} parent=1 // pred_check_branch
      %14 = sbr.rel (0) target = $region13
    $region12: #{tpu_custom_call.1} parent=1 // pred_region
      _
    $region13: #{tpu_custom_call.1} parent=1 // pred_fallthru
      _
    %v16 = vld [vmem:[%s0] sm:$0xf]
    %v17 = vld [vmem:[%s0 + $0x4] sm:$0xf]
    %v18 = vld [vmem:[%s0 + $0x8] sm:$0xf]
    %v19 = vld [vmem:[%s0 + $0xc] sm:$0xf]
    %v20 = vld [vmem:[%s0 + $0x10] sm:$0xf]
    %v21 = vld [vmem:[%s0 + $0x14] sm:$0xf]
    %v22 = vld [vmem:[%s0 + $0x18] sm:$0xf]
    %v23 = vld [vmem:[%s0 + $0x1c] sm:$0xf]
    %v24 = vld [vmem:[%s0 + $0x20] sm:$0xf]
    %v25 = vld [vmem:[%s0 + $0x24] sm:$0xf]
    %v26 = vld [vmem:[%s0 + $0x28] sm:$0xf]
    %v27 = vld [vmem:[%s0 + $0x2c] sm:$0xf]
    %v28 = vld [vmem:[%s0 + $0x30] sm:$0xf]
    %v29 = vld [vmem:[%s0 + $0x34] sm:$0xf]
    %v30 = vld [vmem:[%s0 + $0x38] sm:$0xf]
    %v31 = vld [vmem:[%s0 + $0x3c] sm:$0xf]
    %v32 = vld [vmem:[%s0 + $0x40] sm:$0xf]
    %v33 = vld [vmem:[%s0 + $0x44] sm:$0xf]
    %v34 = vld [vmem:[%s0 + $0x48] sm:$0xf]
    %v35 = vld [vmem:[%s0 + $0x4c] sm:$0xf]
    %v36 = vld [vmem:[%s0 + $0x50] sm:$0xf]
    %v37 = vld [vmem:[%s0 + $0x54] sm:$0xf]
    %v38 = vld [vmem:[%s0 + $0x58] sm:$0xf]
    %v39 = vld [vmem:[%s0 + $0x5c] sm:$0xf]
    %v40 = vld [vmem:[%s0 + $0x60] sm:$0xf]
    %v41 = vld [vmem:[%s0 + $0x64] sm:$0xf]
    %v42 = vld [vmem:[%s0 + $0x68] sm:$0xf]
    %v43 = vld [vmem:[%s0 + $0x6c] sm:$0xf]
    %v44 = vld [vmem:[%s0 + $0x70] sm:$0xf]
    %v45 = vld [vmem:[%s0 + $0x74] sm:$0xf]
    %v46 = vld [vmem:[%s0 + $0x78] sm:$0xf]
    %v47 = vld [vmem:[%s0 + $0x7c] sm:$0xf]
    %v48 = vld [vmem:[%s0 + $0x80] sm:$0xf]
    %v49 = vld [vmem:[%s0 + $0x84] sm:$0xf]
    %v50 = vld [vmem:[%s0 + $0x88] sm:$0xf]
    %v51 = vld [vmem:[%s0 + $0x8c] sm:$0xf]
    %v52 = vld [vmem:[%s0 + $0x90] sm:$0xf]
    %v53 = vld [vmem:[%s0 + $0x94] sm:$0xf]
    %v54 = vld [vmem:[%s0 + $0x98] sm:$0xf]
    %v55 = vld [vmem:[%s0 + $0x9c] sm:$0xf]
    %v56 = vld [vmem:[%s0 + $0xa0] sm:$0xf]
    %v57 = vld [vmem:[%s0 + $0xa4] sm:$0xf]
    %v58 = vld [vmem:[%s0 + $0xa8] sm:$0xf]
    %v59 = vld [vmem:[%s0 + $0xac] sm:$0xf]
    %v60 = vld [vmem:[%s0 + $0xb0] sm:$0xf]
    %v61 = vld [vmem:[%s0 + $0xb4] sm:$0xf]
    %v62 = vld [vmem:[%s0 + $0xb8] sm:$0xf]
    %v63 = vld [vmem:[%s0 + $0xbc] sm:$0xf]
    %v64 = vld [vmem:[%s0 + $0xc0] sm:$0xf]
    %v65 = vld [vmem:[%s0 + $0xc4] sm:$0xf]
    %v66 = vld [vmem:[%s0 + $0xc8] sm:$0xf]
    %v67 = vld [vmem:[%s0 + $0xcc] sm:$0xf]
    %v68 = vld [vmem:[%s0 + $0xd0] sm:$0xf]
    %v69 = vld [vmem:[%s0 + $0xd4] sm:$0xf]
    %v70 = vld [vmem:[%s0 + $0xd8] sm:$0xf]
    %v71 = vld [vmem:[%s0 + $0xdc] sm:$0xf]
    %v72 = vld [vmem:[%s0 + $0xe0] sm:$0xf]
    %v73 = vld [vmem:[%s0 + $0xe4] sm:$0xf]
    %v74 = vld [vmem:[%s0 + $0xe8] sm:$0xf]
    %v75 = vld [vmem:[%s0 + $0xec] sm:$0xf]
    %v76 = vld [vmem:[%s0 + $0xf0] sm:$0xf]
    %v77 = vld [vmem:[%s0 + $0xf4] sm:$0xf]
    %v78 = vld [vmem:[%s0 + $0xf8] sm:$0xf]
    %v79 = vld [vmem:[%s0 + $0xfc] sm:$0xf]
    %v80 = vld [vmem:[%s1] sm:$0xff]
    %v81 = vld [vmem:[%s1 + $0x8] sm:$0xff]
    %v82 = vld [vmem:[%s1 + $0x10] sm:$0xff]
    %v83 = vld [vmem:[%s1 + $0x18] sm:$0xff]
    %v84 = vld [vmem:[%s1 + $0x20] sm:$0xff]
    %v85 = vld [vmem:[%s1 + $0x28] sm:$0xff]
    %v86 = vld [vmem:[%s1 + $0x30] sm:$0x11]
    %v151 = vunpack.c.l.b16 %v16
    %v152 = vunpack.c.l.b16 %v17
    %v153 = vunpack.c.l.b16 %v18
    %v154 = vunpack.c.l.b16 %v19
    %v155 = vunpack.c.l.b16 %v20
    %v156 = vunpack.c.l.b16 %v21
    %v157 = vunpack.c.l.b16 %v22
    %v158 = vunpack.c.l.b16 %v23
    %v159 = vunpack.c.l.b16 %v24
    %v160 = vunpack.c.l.b16 %v25
    %v161 = vunpack.c.l.b16 %v26
    %v162 = vunpack.c.l.b16 %v27
    %v163 = vunpack.c.l.b16 %v28
    %v164 = vunpack.c.l.b16 %v29
    %v165 = vunpack.c.l.b16 %v30
    %v166 = vunpack.c.l.b16 %v31
    %v167 = vunpack.c.l.b16 %v32
    %v168 = vunpack.c.l.b16 %v33
    %v169 = vunpack.c.l.b16 %v34
    %v170 = vunpack.c.l.b16 %v35
    %v171 = vunpack.c.l.b16 %v36
    %v172 = vunpack.c.l.b16 %v37
    %v173 = vunpack.c.l.b16 %v38
    %v174 = vunpack.c.l.b16 %v39
    %v175 = vunpack.c.l.b16 %v40
    %v176 = vunpack.c.l.b16 %v41
    %v177 = vunpack.c.l.b16 %v42
    %v178 = vunpack.c.l.b16 %v43
    %v179 = vunpack.c.l.b16 %v44
    %v180 = vunpack.c.l.b16 %v45
    %v181 = vunpack.c.l.b16 %v46
    %v182 = vunpack.c.l.b16 %v47
    %v183 = vunpack.c.l.b16 %v48
    %v184 = vunpack.c.l.b16 %v49
    %v185 = vunpack.c.l.b16 %v50
    %v186 = vunpack.c.l.b16 %v51
    %v187 = vunpack.c.l.b16 %v52
    %v188 = vunpack.c.l.b16 %v53
    %v189 = vunpack.c.l.b16 %v54
    %v190 = vunpack.c.l.b16 %v55
    %v191 = vunpack.c.l.b16 %v56
    %v192 = vunpack.c.l.b16 %v57
    %v193 = vunpack.c.l.b16 %v58
    %v194 = vunpack.c.l.b16 %v59
    %v195 = vunpack.c.l.b16 %v60
    %v196 = vunpack.c.l.b16 %v61
    %v197 = vunpack.c.l.b16 %v62
    %v198 = vunpack.c.l.b16 %v63
    %v199 = vunpack.c.l.b16 %v64
    %v200 = vunpack.c.l.b16 %v65
    %v201 = vunpack.c.l.b16 %v66
    %v202 = vunpack.c.l.b16 %v67
    %v203 = vunpack.c.l.b16 %v68
    %v204 = vunpack.c.l.b16 %v69
    %v205 = vunpack.c.l.b16 %v70
    %v206 = vunpack.c.l.b16 %v71
    %v207 = vunpack.c.l.b16 %v72
    %v208 = vunpack.c.l.b16 %v73
    %v209 = vunpack.c.l.b16 %v74
    %v210 = vunpack.c.l.b16 %v75
    %v211 = vunpack.c.l.b16 %v76
    %v212 = vunpack.c.l.b16 %v77
    %v213 = vunpack.c.l.b16 %v78
    %v214 = vunpack.c.l.b16 %v79
    %v215 = vpack.c.b16 %v152, %v151
    %v216 = vpack.c.b16 %v154, %v153
    %v217 = vpack.c.b16 %v156, %v155
    %v218 = vpack.c.b16 %v158, %v157
    %v219 = vpack.c.b16 %v160, %v159
    %v220 = vpack.c.b16 %v162, %v161
    %v221 = vpack.c.b16 %v164, %v163
    %v222 = vpack.c.b16 %v166, %v165
    %v223 = vpack.c.b16 %v168, %v167
    %v224 = vpack.c.b16 %v170, %v169
    %v225 = vpack.c.b16 %v172, %v171
    %v226 = vpack.c.b16 %v174, %v173
    %v227 = vpack.c.b16 %v176, %v175
    %v228 = vpack.c.b16 %v178, %v177
    %v229 = vpack.c.b16 %v180, %v179
    %v230 = vpack.c.b16 %v182, %v181
    %v231 = vpack.c.b16 %v184, %v183
    %v232 = vpack.c.b16 %v186, %v185
    %v233 = vpack.c.b16 %v188, %v187
    %v234 = vpack.c.b16 %v190, %v189
    %v235 = vpack.c.b16 %v192, %v191
    %v236 = vpack.c.b16 %v194, %v193
    %v237 = vpack.c.b16 %v196, %v195
    %v238 = vpack.c.b16 %v198, %v197
    %v239 = vpack.c.b16 %v200, %v199
    %v240 = vpack.c.b16 %v202, %v201
    %v241 = vpack.c.b16 %v204, %v203
    %v242 = vpack.c.b16 %v206, %v205
    %v243 = vpack.c.b16 %v208, %v207
    %v244 = vpack.c.b16 %v210, %v209
    %v245 = vpack.c.b16 %v212, %v211
    %v246 = vpack.c.b16 %v214, %v213
    %v254 = vunpack.c.l.b16 %v80
    %v255 = vunpack.c.h.b16 %v80
    %v256 = vunpack.c.l.b16 %v81
    %v257 = vunpack.c.h.b16 %v81
    %v258 = vunpack.c.l.b16 %v82
    %v259 = vunpack.c.h.b16 %v82
    %v260 = vunpack.c.l.b16 %v83
    %v261 = vunpack.c.h.b16 %v83
    %v262 = vunpack.c.l.b16 %v84
    %v263 = vunpack.c.h.b16 %v84
    %v264 = vunpack.c.l.b16 %v85
    %v265 = vunpack.c.h.b16 %v85
    %v266 = vunpack.c.l.b16 %v86
    %v267 = vunpack.c.h.b16 %v86
    %v268 = vpack.c.b16 %v256, %v254
    %v269 = vpack.c.b16 %v257, %v255
    %v270 = vpack.c.b16 %v260, %v258
    %v271 = vpack.c.b16 %v261, %v259
    %v272 = vpack.c.b16 %v264, %v262
    %v273 = vpack.c.b16 %v265, %v263
    %v274 = vpack.c.b16 %v266, %v266
    %v275 = vpack.c.b16 %v267, %v267
    %vm282 = vcmask 400384
    %v284 = vsel %vm282, %v215, 0
    %v287 = vsel %vm282, %v216, 0
    %v290 = vsel %vm282, %v217, 0
    %v293 = vsel %vm282, %v218, 0
    %v296 = vsel %vm282, %v219, 0
    %v299 = vsel %vm282, %v220, 0
    %v302 = vsel %vm282, %v221, 0
    %v305 = vsel %vm282, %v222, 0
    %v308 = vsel %vm282, %v223, 0
    %v311 = vsel %vm282, %v224, 0
    %v314 = vsel %vm282, %v225, 0
    %v317 = vsel %vm282, %v226, 0
    %v320 = vsel %vm282, %v227, 0
    %v323 = vsel %vm282, %v228, 0
    %v326 = vsel %vm282, %v229, 0
    %v329 = vsel %vm282, %v230, 0
    %v332 = vsel %vm282, %v231, 0
    %v335 = vsel %vm282, %v232, 0
    %v338 = vsel %vm282, %v233, 0
    %v341 = vsel %vm282, %v234, 0
    %v344 = vsel %vm282, %v235, 0
    %v347 = vsel %vm282, %v236, 0
    %v350 = vsel %vm282, %v237, 0
    %v353 = vsel %vm282, %v238, 0
    %v356 = vsel %vm282, %v239, 0
    %v359 = vsel %vm282, %v240, 0
    %v362 = vsel %vm282, %v241, 0
    %v365 = vsel %vm282, %v242, 0
    %v368 = vsel %vm282, %v243, 0
    %v371 = vsel %vm282, %v244, 0
    %v374 = vsel %vm282, %v245, 0
    %v377 = vsel %vm282, %v246, 0
    %vm379 = vcmask 1040384
    %v380 = vsel 0, 4294967295, 65535
    %v381 = vsel %vm379, %v380, 0
    %v383 = vand.u32 %v274, %v381
    %v386 = vand.u32 %v275, %v381
    %388 = vmatpush.bf16.msra.mxu0 0
    %389 = vmatpush.bf16.msra.mxu0 0
    %390 = vmatpush.bf16.msra.mxu0 0
    %391 = vmatpush.bf16.msra.mxu0 0
    %392 = vmatpush.bf16.msra.mxu0 %v383
    %393 = vmatpush.bf16.msra.mxu0 %v272
    %394 = vmatpush.bf16.msra.mxu0 %v270
    %395 = vmatpush.bf16.msra.mxu0 %v268
    %396 = vmatmul.bf16.gmra.mxu0 %v284
    %v397 = vpop.f32.mrf.mxu0
    %v398 = vadd.f32 0.0, %v397
    %v399 = vpop.f32.mrf.mxu0
    %v400 = vadd.f32 0.0, %v399
    %401 = vmatmul.bf16.gmra.mxu0 %v287
    %v402 = vpop.f32.mrf.mxu0
    %v403 = vadd.f32 0.0, %v402
    %v404 = vpop.f32.mrf.mxu0
    %v405 = vadd.f32 0.0, %v404
    %406 = vmatmul.bf16.gmra.mxu0 %v290
    %v407 = vpop.f32.mrf.mxu0
    %v408 = vadd.f32 0.0, %v407
    %v409 = vpop.f32.mrf.mxu0
    %v410 = vadd.f32 0.0, %v409
    %411 = vmatmul.bf16.gmra.mxu0 %v293
    %v412 = vpop.f32.mrf.mxu0
    %v413 = vadd.f32 0.0, %v412
    %v414 = vpop.f32.mrf.mxu0
    %v415 = vadd.f32 0.0, %v414
    %416 = vmatmul.bf16.gmra.mxu0 %v296
    %v417 = vpop.f32.mrf.mxu0
    %v418 = vadd.f32 0.0, %v417
    %v419 = vpop.f32.mrf.mxu0
    %v420 = vadd.f32 0.0, %v419
    %421 = vmatmul.bf16.gmra.mxu0 %v299
    %v422 = vpop.f32.mrf.mxu0
    %v423 = vadd.f32 0.0, %v422
    %v424 = vpop.f32.mrf.mxu0
    %v425 = vadd.f32 0.0, %v424
    %426 = vmatmul.bf16.gmra.mxu0 %v302
    %v427 = vpop.f32.mrf.mxu0
    %v428 = vadd.f32 0.0, %v427
    %v429 = vpop.f32.mrf.mxu0
    %v430 = vadd.f32 0.0, %v429
    %431 = vmatmul.bf16.gmra.mxu0 %v305
    %v432 = vpop.f32.mrf.mxu0
    %v433 = vadd.f32 0.0, %v432
    %v434 = vpop.f32.mrf.mxu0
    %v435 = vadd.f32 0.0, %v434
    %436 = vmatmul.bf16.gmra.mxu0 %v308
    %v437 = vpop.f32.mrf.mxu0
    %v438 = vadd.f32 0.0, %v437
    %v439 = vpop.f32.mrf.mxu0
    %v440 = vadd.f32 0.0, %v439
    %441 = vmatmul.bf16.gmra.mxu0 %v311
    %v442 = vpop.f32.mrf.mxu0
    %v443 = vadd.f32 0.0, %v442
    %v444 = vpop.f32.mrf.mxu0
    %v445 = vadd.f32 0.0, %v444
    %446 = vmatmul.bf16.gmra.mxu0 %v314
    %v447 = vpop.f32.mrf.mxu0
    %v448 = vadd.f32 0.0, %v447
    %v449 = vpop.f32.mrf.mxu0
    %v450 = vadd.f32 0.0, %v449
    %451 = vmatmul.bf16.gmra.mxu0 %v317
    %v452 = vpop.f32.mrf.mxu0
    %v453 = vadd.f32 0.0, %v452
    %v454 = vpop.f32.mrf.mxu0
    %v455 = vadd.f32 0.0, %v454
    %456 = vmatmul.bf16.gmra.mxu0 %v320
    %v457 = vpop.f32.mrf.mxu0
    %v458 = vadd.f32 0.0, %v457
    %v459 = vpop.f32.mrf.mxu0
    %v460 = vadd.f32 0.0, %v459
    %461 = vmatmul.bf16.gmra.mxu0 %v323
    %v462 = vpop.f32.mrf.mxu0
    %v463 = vadd.f32 0.0, %v462
    %v464 = vpop.f32.mrf.mxu0
    %v465 = vadd.f32 0.0, %v464
    %466 = vmatmul.bf16.gmra.mxu0 %v326
    %v467 = vpop.f32.mrf.mxu0
    %v468 = vadd.f32 0.0, %v467
    %v469 = vpop.f32.mrf.mxu0
    %v470 = vadd.f32 0.0, %v469
    %471 = vmatmul.bf16.gmra.mxu0 %v329
    %v472 = vpop.f32.mrf.mxu0
    %v473 = vadd.f32 0.0, %v472
    %v474 = vpop.f32.mrf.mxu0
    %v475 = vadd.f32 0.0, %v474
    %476 = vmatmul.bf16.gmra.mxu0 %v332
    %v477 = vpop.f32.mrf.mxu0
    %v478 = vadd.f32 0.0, %v477
    %v479 = vpop.f32.mrf.mxu0
    %v480 = vadd.f32 0.0, %v479
    %481 = vmatmul.bf16.gmra.mxu0 %v335
    %v482 = vpop.f32.mrf.mxu0
    %v483 = vadd.f32 0.0, %v482
    %v484 = vpop.f32.mrf.mxu0
    %v485 = vadd.f32 0.0, %v484
    %486 = vmatmul.bf16.gmra.mxu0 %v338
    %v487 = vpop.f32.mrf.mxu0
    %v488 = vadd.f32 0.0, %v487
    %v489 = vpop.f32.mrf.mxu0
    %v490 = vadd.f32 0.0, %v489
    %491 = vmatmul.bf16.gmra.mxu0 %v341
    %v492 = vpop.f32.mrf.mxu0
    %v493 = vadd.f32 0.0, %v492
    %v494 = vpop.f32.mrf.mxu0
    %v495 = vadd.f32 0.0, %v494
    %496 = vmatmul.bf16.gmra.mxu0 %v344
    %v497 = vpop.f32.mrf.mxu0
    %v498 = vadd.f32 0.0, %v497
    %v499 = vpop.f32.mrf.mxu0
    %v500 = vadd.f32 0.0, %v499
    %501 = vmatmul.bf16.gmra.mxu0 %v347
    %v502 = vpop.f32.mrf.mxu0
    %v503 = vadd.f32 0.0, %v502
    %v504 = vpop.f32.mrf.mxu0
    %v505 = vadd.f32 0.0, %v504
    %506 = vmatmul.bf16.gmra.mxu0 %v350
    %v507 = vpop.f32.mrf.mxu0
    %v508 = vadd.f32 0.0, %v507
    %v509 = vpop.f32.mrf.mxu0
    %v510 = vadd.f32 0.0, %v509
    %511 = vmatmul.bf16.gmra.mxu0 %v353
    %v512 = vpop.f32.mrf.mxu0
    %v513 = vadd.f32 0.0, %v512
    %v514 = vpop.f32.mrf.mxu0
    %v515 = vadd.f32 0.0, %v514
    %516 = vmatmul.bf16.gmra.mxu0 %v356
    %v517 = vpop.f32.mrf.mxu0
    %v518 = vadd.f32 0.0, %v517
    %v519 = vpop.f32.mrf.mxu0
    %v520 = vadd.f32 0.0, %v519
    %521 = vmatmul.bf16.gmra.mxu0 %v359
    %v522 = vpop.f32.mrf.mxu0
    %v523 = vadd.f32 0.0, %v522
    %v524 = vpop.f32.mrf.mxu0
    %v525 = vadd.f32 0.0, %v524
    %526 = vmatmul.bf16.gmra.mxu0 %v362
    %v527 = vpop.f32.mrf.mxu0
    %v528 = vadd.f32 0.0, %v527
    %v529 = vpop.f32.mrf.mxu0
    %v530 = vadd.f32 0.0, %v529
    %531 = vmatmul.bf16.gmra.mxu0 %v365
    %v532 = vpop.f32.mrf.mxu0
    %v533 = vadd.f32 0.0, %v532
    %v534 = vpop.f32.mrf.mxu0
    %v535 = vadd.f32 0.0, %v534
    %536 = vmatmul.bf16.gmra.mxu0 %v368
    %v537 = vpop.f32.mrf.mxu0
    %v538 = vadd.f32 0.0, %v537
    %v539 = vpop.f32.mrf.mxu0
    %v540 = vadd.f32 0.0, %v539
    %541 = vmatmul.bf16.gmra.mxu0 %v371
    %v542 = vpop.f32.mrf.mxu0
    %v543 = vadd.f32 0.0, %v542
    %v544 = vpop.f32.mrf.mxu0
    %v545 = vadd.f32 0.0, %v544
    %546 = vmatmul.bf16.gmra.mxu0 %v374
    %v547 = vpop.f32.mrf.mxu0
    %v548 = vadd.f32 0.0, %v547
    %v549 = vpop.f32.mrf.mxu0
    %v550 = vadd.f32 0.0, %v549
    %551 = vmatmul.bf16.gmra.mxu0 %v377
    %v552 = vpop.f32.mrf.mxu0
    %v553 = vadd.f32 0.0, %v552
    %v554 = vpop.f32.mrf.mxu0
    %v555 = vadd.f32 0.0, %v554
    %556 = vdwg.mxu0
    %557 = vmatpush.bf16.msra.mxu0 0
    %558 = vmatpush.bf16.msra.mxu0 0
    %559 = vmatpush.bf16.msra.mxu0 0
    %560 = vmatpush.bf16.msra.mxu0 0
    %561 = vmatpush.bf16.msra.mxu0 %v386
    %562 = vmatpush.bf16.msra.mxu0 %v273
    %563 = vmatpush.bf16.msra.mxu0 %v271
    %564 = vmatpush.bf16.msra.mxu0 %v269
    %565 = vmatmul.bf16.gmra.mxu0 %v284
    %v566 = vpop.f32.mrf.mxu0
    %v567 = vadd.f32 0.0, %v566
    %v568 = vpop.f32.mrf.mxu0
    %v569 = vadd.f32 0.0, %v568
    %570 = vmatmul.bf16.gmra.mxu0 %v287
    %v571 = vpop.f32.mrf.mxu0
    %v572 = vadd.f32 0.0, %v571
    %v573 = vpop.f32.mrf.mxu0
    %v574 = vadd.f32 0.0, %v573
    %575 = vmatmul.bf16.gmra.mxu0 %v290
    %v576 = vpop.f32.mrf.mxu0
    %v577 = vadd.f32 0.0, %v576
    %v578 = vpop.f32.mrf.mxu0
    %v579 = vadd.f32 0.0, %v578
    %580 = vmatmul.bf16.gmra.mxu0 %v293
    %v581 = vpop.f32.mrf.mxu0
    %v582 = vadd.f32 0.0, %v581
    %v583 = vpop.f32.mrf.mxu0
    %v584 = vadd.f32 0.0, %v583
    %585 = vmatmul.bf16.gmra.mxu0 %v296
    %v586 = vpop.f32.mrf.mxu0
    %v587 = vadd.f32 0.0, %v586
    %v588 = vpop.f32.mrf.mxu0
    %v589 = vadd.f32 0.0, %v588
    %590 = vmatmul.bf16.gmra.mxu0 %v299
    %v591 = vpop.f32.mrf.mxu0
    %v592 = vadd.f32 0.0, %v591
    %v593 = vpop.f32.mrf.mxu0
    %v594 = vadd.f32 0.0, %v593
    %595 = vmatmul.bf16.gmra.mxu0 %v302
    %v596 = vpop.f32.mrf.mxu0
    %v597 = vadd.f32 0.0, %v596
    %v598 = vpop.f32.mrf.mxu0
    %v599 = vadd.f32 0.0, %v598
    %600 = vmatmul.bf16.gmra.mxu0 %v305
    %v601 = vpop.f32.mrf.mxu0
    %v602 = vadd.f32 0.0, %v601
    %v603 = vpop.f32.mrf.mxu0
    %v604 = vadd.f32 0.0, %v603
    %605 = vmatmul.bf16.gmra.mxu0 %v308
    %v606 = vpop.f32.mrf.mxu0
    %v607 = vadd.f32 0.0, %v606
    %v608 = vpop.f32.mrf.mxu0
    %v609 = vadd.f32 0.0, %v608
    %610 = vmatmul.bf16.gmra.mxu0 %v311
    %v611 = vpop.f32.mrf.mxu0
    %v612 = vadd.f32 0.0, %v611
    %v613 = vpop.f32.mrf.mxu0
    %v614 = vadd.f32 0.0, %v613
    %615 = vmatmul.bf16.gmra.mxu0 %v314
    %v616 = vpop.f32.mrf.mxu0
    %v617 = vadd.f32 0.0, %v616
    %v618 = vpop.f32.mrf.mxu0
    %v619 = vadd.f32 0.0, %v618
    %620 = vmatmul.bf16.gmra.mxu0 %v317
    %v621 = vpop.f32.mrf.mxu0
    %v622 = vadd.f32 0.0, %v621
    %v623 = vpop.f32.mrf.mxu0
    %v624 = vadd.f32 0.0, %v623
    %625 = vmatmul.bf16.gmra.mxu0 %v320
    %v626 = vpop.f32.mrf.mxu0
    %v627 = vadd.f32 0.0, %v626
    %v628 = vpop.f32.mrf.mxu0
    %v629 = vadd.f32 0.0, %v628
    %630 = vmatmul.bf16.gmra.mxu0 %v323
    %v631 = vpop.f32.mrf.mxu0
    %v632 = vadd.f32 0.0, %v631
    %v633 = vpop.f32.mrf.mxu0
    %v634 = vadd.f32 0.0, %v633
    %635 = vmatmul.bf16.gmra.mxu0 %v326
    %v636 = vpop.f32.mrf.mxu0
    %v637 = vadd.f32 0.0, %v636
    %v638 = vpop.f32.mrf.mxu0
    %v639 = vadd.f32 0.0, %v638
    %640 = vmatmul.bf16.gmra.mxu0 %v329
    %v641 = vpop.f32.mrf.mxu0
    %v642 = vadd.f32 0.0, %v641
    %v643 = vpop.f32.mrf.mxu0
    %v644 = vadd.f32 0.0, %v643
    %645 = vmatmul.bf16.gmra.mxu0 %v332
    %v646 = vpop.f32.mrf.mxu0
    %v647 = vadd.f32 0.0, %v646
    %v648 = vpop.f32.mrf.mxu0
    %v649 = vadd.f32 0.0, %v648
    %650 = vmatmul.bf16.gmra.mxu0 %v335
    %v651 = vpop.f32.mrf.mxu0
    %v652 = vadd.f32 0.0, %v651
    %v653 = vpop.f32.mrf.mxu0
    %v654 = vadd.f32 0.0, %v653
    %655 = vmatmul.bf16.gmra.mxu0 %v338
    %v656 = vpop.f32.mrf.mxu0
    %v657 = vadd.f32 0.0, %v656
    %v658 = vpop.f32.mrf.mxu0
    %v659 = vadd.f32 0.0, %v658
    %660 = vmatmul.bf16.gmra.mxu0 %v341
    %v661 = vpop.f32.mrf.mxu0
    %v662 = vadd.f32 0.0, %v661
    %v663 = vpop.f32.mrf.mxu0
    %v664 = vadd.f32 0.0, %v663
    %665 = vmatmul.bf16.gmra.mxu0 %v344
    %v666 = vpop.f32.mrf.mxu0
    %v667 = vadd.f32 0.0, %v666
    %v668 = vpop.f32.mrf.mxu0
    %v669 = vadd.f32 0.0, %v668
    %670 = vmatmul.bf16.gmra.mxu0 %v347
    %v671 = vpop.f32.mrf.mxu0
    %v672 = vadd.f32 0.0, %v671
    %v673 = vpop.f32.mrf.mxu0
    %v674 = vadd.f32 0.0, %v673
    %675 = vmatmul.bf16.gmra.mxu0 %v350
    %v676 = vpop.f32.mrf.mxu0
    %v677 = vadd.f32 0.0, %v676
    %v678 = vpop.f32.mrf.mxu0
    %v679 = vadd.f32 0.0, %v678
    %680 = vmatmul.bf16.gmra.mxu0 %v353
    %v681 = vpop.f32.mrf.mxu0
    %v682 = vadd.f32 0.0, %v681
    %v683 = vpop.f32.mrf.mxu0
    %v684 = vadd.f32 0.0, %v683
    %685 = vmatmul.bf16.gmra.mxu0 %v356
    %v686 = vpop.f32.mrf.mxu0
    %v687 = vadd.f32 0.0, %v686
    %v688 = vpop.f32.mrf.mxu0
    %v689 = vadd.f32 0.0, %v688
    %690 = vmatmul.bf16.gmra.mxu0 %v359
    %v691 = vpop.f32.mrf.mxu0
    %v692 = vadd.f32 0.0, %v691
    %v693 = vpop.f32.mrf.mxu0
    %v694 = vadd.f32 0.0, %v693
    %695 = vmatmul.bf16.gmra.mxu0 %v362
    %v696 = vpop.f32.mrf.mxu0
    %v697 = vadd.f32 0.0, %v696
    %v698 = vpop.f32.mrf.mxu0
    %v699 = vadd.f32 0.0, %v698
    %700 = vmatmul.bf16.gmra.mxu0 %v365
    %v701 = vpop.f32.mrf.mxu0
    %v702 = vadd.f32 0.0, %v701
    %v703 = vpop.f32.mrf.mxu0
    %v704 = vadd.f32 0.0, %v703
    %705 = vmatmul.bf16.gmra.mxu0 %v368
    %v706 = vpop.f32.mrf.mxu0
    %v707 = vadd.f32 0.0, %v706
    %v708 = vpop.f32.mrf.mxu0
    %v709 = vadd.f32 0.0, %v708
    %710 = vmatmul.bf16.gmra.mxu0 %v371
    %v711 = vpop.f32.mrf.mxu0
    %v712 = vadd.f32 0.0, %v711
    %v713 = vpop.f32.mrf.mxu0
    %v714 = vadd.f32 0.0, %v713
    %715 = vmatmul.bf16.gmra.mxu0 %v374
    %v716 = vpop.f32.mrf.mxu0
    %v717 = vadd.f32 0.0, %v716
    %v718 = vpop.f32.mrf.mxu0
    %v719 = vadd.f32 0.0, %v718
    %720 = vmatmul.bf16.gmra.mxu0 %v377
    %v721 = vpop.f32.mrf.mxu0
    %v722 = vadd.f32 0.0, %v721
    %v723 = vpop.f32.mrf.mxu0
    %v724 = vadd.f32 0.0, %v723
    %725 = vdwg.mxu0
    %v726 = vld [vmem:[%s2] sm:$0xff]
    %v727 = vld [vmem:[%s2 + $0x8] sm:$0xff]
    %v728 = vld [vmem:[%s2 + $0x10] sm:$0xff]
    %v729 = vld [vmem:[%s2 + $0x18] sm:$0xff]
    %v730 = vld [vmem:[%s2 + $0x20] sm:$0xff]
    %v731 = vld [vmem:[%s2 + $0x28] sm:$0xff]
    %v732 = vld [vmem:[%s2 + $0x30] sm:$0xff]
    %v733 = vld [vmem:[%s2 + $0x38] sm:$0xff]
    %v734 = vld [vmem:[%s2 + $0x40] sm:$0xff]
    %v735 = vld [vmem:[%s2 + $0x48] sm:$0xff]
    %v736 = vld [vmem:[%s2 + $0x50] sm:$0xff]
    %v737 = vld [vmem:[%s2 + $0x58] sm:$0xff]
    %v738 = vld [vmem:[%s2 + $0x60] sm:$0xff]
    %v739 = vld [vmem:[%s2 + $0x68] sm:$0xff]
    %v740 = vld [vmem:[%s2 + $0x70] sm:$0xff]
    %v741 = vld [vmem:[%s2 + $0x78] sm:$0xff]
    %v742 = vadd.f32 %v398, %v726
    %v743 = vadd.f32 %v567, %v727
    %v744 = vadd.f32 %v400, %v728
    %v745 = vadd.f32 %v569, %v729
    %v746 = vadd.f32 %v403, %v730
    %v747 = vadd.f32 %v572, %v731
    %v748 = vadd.f32 %v405, %v732
    %v749 = vadd.f32 %v574, %v733
    %v750 = vadd.f32 %v408, %v734
    %v751 = vadd.f32 %v577, %v735
    %v752 = vadd.f32 %v410, %v736
    %v753 = vadd.f32 %v579, %v737
    %v754 = vadd.f32 %v413, %v738
    %v755 = vadd.f32 %v582, %v739
    %v756 = vadd.f32 %v415, %v740
    %v757 = vadd.f32 %v584, %v741
    %v758 = vadd.f32 %v418, %v726
    %v759 = vadd.f32 %v587, %v727
    %v760 = vadd.f32 %v420, %v728
    %v761 = vadd.f32 %v589, %v729
    %v762 = vadd.f32 %v423, %v730
    %v763 = vadd.f32 %v592, %v731
    %v764 = vadd.f32 %v425, %v732
    %v765 = vadd.f32 %v594, %v733
    %v766 = vadd.f32 %v428, %v734
    %v767 = vadd.f32 %v597, %v735
    %v768 = vadd.f32 %v430, %v736
    %v769 = vadd.f32 %v599, %v737
    %v770 = vadd.f32 %v433, %v738
    %v771 = vadd.f32 %v602, %v739
    %v772 = vadd.f32 %v435, %v740
    %v773 = vadd.f32 %v604, %v741
    %v774 = vadd.f32 %v438, %v726
    %v775 = vadd.f32 %v607, %v727
    %v776 = vadd.f32 %v440, %v728
    %v777 = vadd.f32 %v609, %v729
    %v778 = vadd.f32 %v443, %v730
    %v779 = vadd.f32 %v612, %v731
    %v780 = vadd.f32 %v445, %v732
    %v781 = vadd.f32 %v614, %v733
    %v782 = vadd.f32 %v448, %v734
    %v783 = vadd.f32 %v617, %v735
    %v784 = vadd.f32 %v450, %v736
    %v785 = vadd.f32 %v619, %v737
    %v786 = vadd.f32 %v453, %v738
    %v787 = vadd.f32 %v622, %v739
    %v788 = vadd.f32 %v455, %v740
    %v789 = vadd.f32 %v624, %v741
    %v790 = vadd.f32 %v458, %v726
    %v791 = vadd.f32 %v627, %v727
    %v792 = vadd.f32 %v460, %v728
    %v793 = vadd.f32 %v629, %v729
    %v794 = vadd.f32 %v463, %v730
    %v795 = vadd.f32 %v632, %v731
    %v796 = vadd.f32 %v465, %v732
    %v797 = vadd.f32 %v634, %v733
    %v798 = vadd.f32 %v468, %v734
    %v799 = vadd.f32 %v637, %v735
    %v800 = vadd.f32 %v470, %v736
    %v801 = vadd.f32 %v639, %v737
    %v802 = vadd.f32 %v473, %v738
    %v803 = vadd.f32 %v642, %v739
    %v804 = vadd.f32 %v475, %v740
    %v805 = vadd.f32 %v644, %v741
    %v806 = vadd.f32 %v478, %v726
    %v807 = vadd.f32 %v647, %v727
    %v808 = vadd.f32 %v480, %v728
    %v809 = vadd.f32 %v649, %v729
    %v810 = vadd.f32 %v483, %v730
    %v811 = vadd.f32 %v652, %v731
    %v812 = vadd.f32 %v485, %v732
    %v813 = vadd.f32 %v654, %v733
    %v814 = vadd.f32 %v488, %v734
    %v815 = vadd.f32 %v657, %v735
    %v816 = vadd.f32 %v490, %v736
    %v817 = vadd.f32 %v659, %v737
    %v818 = vadd.f32 %v493, %v738
    %v819 = vadd.f32 %v662, %v739
    %v820 = vadd.f32 %v495, %v740
    %v821 = vadd.f32 %v664, %v741
    %v822 = vadd.f32 %v498, %v726
    %v823 = vadd.f32 %v667, %v727
    %v824 = vadd.f32 %v500, %v728
    %v825 = vadd.f32 %v669, %v729
    %v826 = vadd.f32 %v503, %v730
    %v827 = vadd.f32 %v672, %v731
    %v828 = vadd.f32 %v505, %v732
    %v829 = vadd.f32 %v674, %v733
    %v830 = vadd.f32 %v508, %v734
    %v831 = vadd.f32 %v677, %v735
    %v832 = vadd.f32 %v510, %v736
    %v833 = vadd.f32 %v679, %v737
    %v834 = vadd.f32 %v513, %v738
    %v835 = vadd.f32 %v682, %v739
    %v836 = vadd.f32 %v515, %v740
    %v837 = vadd.f32 %v684, %v741
    %v838 = vadd.f32 %v518, %v726
    %v839 = vadd.f32 %v687, %v727
    %v840 = vadd.f32 %v520, %v728
    %v841 = vadd.f32 %v689, %v729
    %v842 = vadd.f32 %v523, %v730
    %v843 = vadd.f32 %v692, %v731
    %v844 = vadd.f32 %v525, %v732
    %v845 = vadd.f32 %v694, %v733
    %v846 = vadd.f32 %v528, %v734
    %v847 = vadd.f32 %v697, %v735
    %v848 = vadd.f32 %v530, %v736
    %v849 = vadd.f32 %v699, %v737
    %v850 = vadd.f32 %v533, %v738
    %v851 = vadd.f32 %v702, %v739
    %v852 = vadd.f32 %v535, %v740
    %v853 = vadd.f32 %v704, %v741
    %v854 = vadd.f32 %v538, %v726
    %v855 = vadd.f32 %v707, %v727
    %v856 = vadd.f32 %v540, %v728
    %v857 = vadd.f32 %v709, %v729
    %v858 = vadd.f32 %v543, %v730
    %v859 = vadd.f32 %v712, %v731
    %v860 = vadd.f32 %v545, %v732
    %v861 = vadd.f32 %v714, %v733
    %v862 = vadd.f32 %v548, %v734
    %v863 = vadd.f32 %v717, %v735
    %v864 = vadd.f32 %v550, %v736
    %v865 = vadd.f32 %v719, %v737
    %v866 = vadd.f32 %v553, %v738
    %v867 = vadd.f32 %v722, %v739
    %v868 = vadd.f32 %v555, %v740
    %v869 = vadd.f32 %v724, %v741
    %870 = vst [vmem:[#allocation2] sm:$0xff] %v742
    %871 = vst [vmem:[#allocation2 + $0x8] sm:$0xff] %v743
    %872 = vst [vmem:[#allocation2 + $0x10] sm:$0xff] %v744
    %873 = vst [vmem:[#allocation2 + $0x18] sm:$0xff] %v745
    %874 = vst [vmem:[#allocation2 + $0x20] sm:$0xff] %v746
    %875 = vst [vmem:[#allocation2 + $0x28] sm:$0xff] %v747
    %876 = vst [vmem:[#allocation2 + $0x30] sm:$0xff] %v748
    %877 = vst [vmem:[#allocation2 + $0x38] sm:$0xff] %v749
    %878 = vst [vmem:[#allocation2 + $0x40] sm:$0xff] %v750
    %879 = vst [vmem:[#allocation2 + $0x48] sm:$0xff] %v751
    %880 = vst [vmem:[#allocation2 + $0x50] sm:$0xff] %v752
    %881 = vst [vmem:[#allocation2 + $0x58] sm:$0xff] %v753
    %882 = vst [vmem:[#allocation2 + $0x60] sm:$0xff] %v754
    %883 = vst [vmem:[#allocation2 + $0x68] sm:$0xff] %v755
    %884 = vst [vmem:[#allocation2 + $0x70] sm:$0xff] %v756
    %885 = vst [vmem:[#allocation2 + $0x78] sm:$0xff] %v757
    %886 = vst [vmem:[#allocation2 + $0x80] sm:$0xff] %v758
    %887 = vst [vmem:[#allocation2 + $0x88] sm:$0xff] %v759
    %888 = vst [vmem:[#allocation2 + $0x90] sm:$0xff] %v760
    %889 = vst [vmem:[#allocation2 + $0x98] sm:$0xff] %v761
    %890 = vst [vmem:[#allocation2 + $0xa0] sm:$0xff] %v762
    %891 = vst [vmem:[#allocation2 + $0xa8] sm:$0xff] %v763
    %892 = vst [vmem:[#allocation2 + $0xb0] sm:$0xff] %v764
    %893 = vst [vmem:[#allocation2 + $0xb8] sm:$0xff] %v765
    %894 = vst [vmem:[#allocation2 + $0xc0] sm:$0xff] %v766
    %895 = vst [vmem:[#allocation2 + $0xc8] sm:$0xff] %v767
    %896 = vst [vmem:[#allocation2 + $0xd0] sm:$0xff] %v768
    %897 = vst [vmem:[#allocation2 + $0xd8] sm:$0xff] %v769
    %898 = vst [vmem:[#allocation2 + $0xe0] sm:$0xff] %v770
    %899 = vst [vmem:[#allocation2 + $0xe8] sm:$0xff] %v771
    %900 = vst [vmem:[#allocation2 + $0xf0] sm:$0xff] %v772
    %901 = vst [vmem:[#allocation2 + $0xf8] sm:$0xff] %v773
    %902 = vst [vmem:[#allocation2 + $0x100] sm:$0xff] %v774
    %903 = vst [vmem:[#allocation2 + $0x108] sm:$0xff] %v775
    %904 = vst [vmem:[#allocation2 + $0x110] sm:$0xff] %v776
    %905 = vst [vmem:[#allocation2 + $0x118] sm:$0xff] %v777
    %906 = vst [vmem:[#allocation2 + $0x120] sm:$0xff] %v778
    %907 = vst [vmem:[#allocation2 + $0x128] sm:$0xff] %v779
    %908 = vst [vmem:[#allocation2 + $0x130] sm:$0xff] %v780
    %909 = vst [vmem:[#allocation2 + $0x138] sm:$0xff] %v781
    %910 = vst [vmem:[#allocation2 + $0x140] sm:$0xff] %v782
    %911 = vst [vmem:[#allocation2 + $0x148] sm:$0xff] %v783
    %912 = vst [vmem:[#allocation2 + $0x150] sm:$0xff] %v784
    %913 = vst [vmem:[#allocation2 + $0x158] sm:$0xff] %v785
    %914 = vst [vmem:[#allocation2 + $0x160] sm:$0xff] %v786
    %915 = vst [vmem:[#allocation2 + $0x168] sm:$0xff] %v787
    %916 = vst [vmem:[#allocation2 + $0x170] sm:$0xff] %v788
    %917 = vst [vmem:[#allocation2 + $0x178] sm:$0xff] %v789
    %918 = vst [vmem:[#allocation2 + $0x180] sm:$0xff] %v790
    %919 = vst [vmem:[#allocation2 + $0x188] sm:$0xff] %v791
    %920 = vst [vmem:[#allocation2 + $0x190] sm:$0xff] %v792
    %921 = vst [vmem:[#allocation2 + $0x198] sm:$0xff] %v793
    %922 = vst [vmem:[#allocation2 + $0x1a0] sm:$0xff] %v794
    %923 = vst [vmem:[#allocation2 + $0x1a8] sm:$0xff] %v795
    %924 = vst [vmem:[#allocation2 + $0x1b0] sm:$0xff] %v796
    %925 = vst [vmem:[#allocation2 + $0x1b8] sm:$0xff] %v797
    %926 = vst [vmem:[#allocation2 + $0x1c0] sm:$0xff] %v798
    %927 = vst [vmem:[#allocation2 + $0x1c8] sm:$0xff] %v799
    %928 = vst [vmem:[#allocation2 + $0x1d0] sm:$0xff] %v800
    %929 = vst [vmem:[#allocation2 + $0x1d8] sm:$0xff] %v801
    %930 = vst [vmem:[#allocation2 + $0x1e0] sm:$0xff] %v802
    %931 = vst [vmem:[#allocation2 + $0x1e8] sm:$0xff] %v803
    %932 = vst [vmem:[#allocation2 + $0x1f0] sm:$0xff] %v804
    %933 = vst [vmem:[#allocation2 + $0x1f8] sm:$0xff] %v805
    %934 = vst [vmem:[#allocation2 + $0x200] sm:$0xff] %v806
    %935 = vst [vmem:[#allocation2 + $0x208] sm:$0xff] %v807
    %936 = vst [vmem:[#allocation2 + $0x210] sm:$0xff] %v808
    %937 = vst [vmem:[#allocation2 + $0x218] sm:$0xff] %v809
    %938 = vst [vmem:[#allocation2 + $0x220] sm:$0xff] %v810
    %939 = vst [vmem:[#allocation2 + $0x228] sm:$0xff] %v811
    %940 = vst [vmem:[#allocation2 + $0x230] sm:$0xff] %v812
    %941 = vst [vmem:[#allocation2 + $0x238] sm:$0xff] %v813
    %942 = vst [vmem:[#allocation2 + $0x240] sm:$0xff] %v814
    %943 = vst [vmem:[#allocation2 + $0x248] sm:$0xff] %v815
    %944 = vst [vmem:[#allocation2 + $0x250] sm:$0xff] %v816
    %945 = vst [vmem:[#allocation2 + $0x258] sm:$0xff] %v817
    %946 = vst [vmem:[#allocation2 + $0x260] sm:$0xff] %v818
    %947 = vst [vmem:[#allocation2 + $0x268] sm:$0xff] %v819
    %948 = vst [vmem:[#allocation2 + $0x270] sm:$0xff] %v820
    %949 = vst [vmem:[#allocation2 + $0x278] sm:$0xff] %v821
    %950 = vst [vmem:[#allocation2 + $0x280] sm:$0xff] %v822
    %951 = vst [vmem:[#allocation2 + $0x288] sm:$0xff] %v823
    %952 = vst [vmem:[#allocation2 + $0x290] sm:$0xff] %v824
    %953 = vst [vmem:[#allocation2 + $0x298] sm:$0xff] %v825
    %954 = vst [vmem:[#allocation2 + $0x2a0] sm:$0xff] %v826
    %955 = vst [vmem:[#allocation2 + $0x2a8] sm:$0xff] %v827
    %956 = vst [vmem:[#allocation2 + $0x2b0] sm:$0xff] %v828
    %957 = vst [vmem:[#allocation2 + $0x2b8] sm:$0xff] %v829
    %958 = vst [vmem:[#allocation2 + $0x2c0] sm:$0xff] %v830
    %959 = vst [vmem:[#allocation2 + $0x2c8] sm:$0xff] %v831
    %960 = vst [vmem:[#allocation2 + $0x2d0] sm:$0xff] %v832
    %961 = vst [vmem:[#allocation2 + $0x2d8] sm:$0xff] %v833
    %962 = vst [vmem:[#allocation2 + $0x2e0] sm:$0xff] %v834
    %963 = vst [vmem:[#allocation2 + $0x2e8] sm:$0xff] %v835
    %964 = vst [vmem:[#allocation2 + $0x2f0] sm:$0xff] %v836
    %965 = vst [vmem:[#allocation2 + $0x2f8] sm:$0xff] %v837
    %966 = vst [vmem:[#allocation2 + $0x300] sm:$0xff] %v838
    %967 = vst [vmem:[#allocation2 + $0x308] sm:$0xff] %v839
    %968 = vst [vmem:[#allocation2 + $0x310] sm:$0xff] %v840
    %969 = vst [vmem:[#allocation2 + $0x318] sm:$0xff] %v841
    %970 = vst [vmem:[#allocation2 + $0x320] sm:$0xff] %v842
    %971 = vst [vmem:[#allocation2 + $0x328] sm:$0xff] %v843
    %972 = vst [vmem:[#allocation2 + $0x330] sm:$0xff] %v844
    %973 = vst [vmem:[#allocation2 + $0x338] sm:$0xff] %v845
    %974 = vst [vmem:[#allocation2 + $0x340] sm:$0xff] %v846
    %975 = vst [vmem:[#allocation2 + $0x348] sm:$0xff] %v847
    %976 = vst [vmem:[#allocation2 + $0x350] sm:$0xff] %v848
    %977 = vst [vmem:[#allocation2 + $0x358] sm:$0xff] %v849
    %978 = vst [vmem:[#allocation2 + $0x360] sm:$0xff] %v850
    %979 = vst [vmem:[#allocation2 + $0x368] sm:$0xff] %v851
    %980 = vst [vmem:[#allocation2 + $0x370] sm:$0xff] %v852
    %981 = vst [vmem:[#allocation2 + $0x378] sm:$0xff] %v853
    %982 = vst [vmem:[#allocation2 + $0x380] sm:$0xff] %v854
    %983 = vst [vmem:[#allocation2 + $0x388] sm:$0xff] %v855
    %984 = vst [vmem:[#allocation2 + $0x390] sm:$0xff] %v856
    %985 = vst [vmem:[#allocation2 + $0x398] sm:$0xff] %v857
    %986 = vst [vmem:[#allocation2 + $0x3a0] sm:$0xff] %v858
    %987 = vst [vmem:[#allocation2 + $0x3a8] sm:$0xff] %v859
    %988 = vst [vmem:[#allocation2 + $0x3b0] sm:$0xff] %v860
    %989 = vst [vmem:[#allocation2 + $0x3b8] sm:$0xff] %v861
    %990 = vst [vmem:[#allocation2 + $0x3c0] sm:$0xff] %v862
    %991 = vst [vmem:[#allocation2 + $0x3c8] sm:$0xff] %v863
    %992 = vst [vmem:[#allocation2 + $0x3d0] sm:$0xff] %v864
    %993 = vst [vmem:[#allocation2 + $0x3d8] sm:$0xff] %v865
    %994 = vst [vmem:[#allocation2 + $0x3e0] sm:$0xff] %v866
    %995 = vst [vmem:[#allocation2 + $0x3e8] sm:$0xff] %v867
    %996 = vst [vmem:[#allocation2 + $0x3f0] sm:$0xff] %v868
    %997 = vst [vmem:[#allocation2 + $0x3f8] sm:$0xff] %v869
    // Predicated region
    $region14: #{tpu_custom_call.1} parent=1 // pred_check
      _
    $region15: #{tpu_custom_call.1} parent=1 // pred_check_branch
      %999 = sbr.rel (0) target = $region17
    $region16: #{tpu_custom_call.1} parent=1 // pred_region
      %1001 = vsyncadd [#allocation3], 0
      %s1002 = sshll.u32 [#allocation2], 4
      %s1003 = int_to_ptr.vmem [resolvable:$true] %s1002
      %s1004 = sshll.u32 %s3, 4
      %s1005 = int_to_ptr.hbm [resolvable:$true] %s1004
      %1010 = dma.vmem_to_hbm [thread:$0]  %s1003, 16384, %s1005, [#allocation3], 256, 256, 16
    $region17: #{tpu_custom_call.1} parent=1 // pred_fallthru
      _
    // Predicated region
    $region18: #{tpu_custom_call.1} parent=1 // pred_check
      _
    $region19: #{tpu_custom_call.1} parent=1 // pred_check_branch
      %1012 = sbr.rel (0) target = $region21
    $region20: #{tpu_custom_call.1} parent=1 // pred_region
      %1014 = dma.done [#allocation3], 16384
    $region21: #{tpu_custom_call.1} parent=1 // pred_fallthru
      _
    %1015 = vsyncpa [#allocation3], 1

</llo_original>
